<compile_context>
chip_gen: v5e
topology: v5e:2x2
jax: 0.10.0
libtpu: 0.0.40
codegen_flags: <defaults>
</compile_context>

<pallas_src>
import jax
import jax.numpy as jnp
import numpy as np
from jax import lax
from jax.experimental import pallas as pl
from jax.experimental.pallas import tpu as pltpu


def _round_up(a, m):
    return ((a + m - 1) // m) * m


def _critic_kernel(x_ref, w1_ref, b1_ref, w2_ref, b2_ref, o_ref):
    # x_ref : [TB, S]  f32, native row-major layout (batch on sublanes).
    # w1_ref: [H, S]   bf16 (PyTorch nn.Linear layout), VMEM-resident.
    # b1_ref: [H, 1]   f32, VMEM-resident.
    # w2_ref: [H, 1]   f32, VMEM-resident.
    # b2_ref: [1, 1]   f32 scalar in SMEM.
    # o_ref : [1, TB]  f32, lane-dense (batch on lanes).
    xb = x_ref[...].astype(w1_ref.dtype)                      # f32 -> bf16 (VPU)
    # h = w1 @ x^T on the MXU (bf16 in, f32 acc); contracting the last dims of
    # both operands puts the x transpose in-kernel on the idle XLU.
    h = lax.dot_general(
        w1_ref[...], xb,
        dimension_numbers=(((1,), (1,)), ((), ())),
        preferred_element_type=jnp.float32)                   # [H, TB]
    h = jnp.tanh(h + b1_ref[...])                             # f32 on VPU/EUP
    # Second layer (out_features == 1): VPU mul + sublane (XLU) reduce; the
    # result is naturally lane-dense [1, TB] -> unmasked-lane store.
    logits = jnp.sum(h * w2_ref[...], axis=0, keepdims=True) + b2_ref[0, 0]
    o_ref[...] = jax.nn.sigmoid(logits).astype(o_ref.dtype)


def critic_forward(x, w1, b1, w2, b2, *, block_b=None, mxu_dtype=jnp.bfloat16):
    """Forward pass of CriticNetwork.

    x : [B, state_dim]   f32 (consumed in native layout, no wrapper-side copy)
    w1: [hdim, state_dim] (PyTorch nn.Linear layout)
    b1: [hdim]
    w2: [1, hdim]
    b2: [1]
    returns [B, 1] f32.
    """
    B, S = x.shape
    H = w1.shape[0]
    assert w1.shape == (H, S), f"w1 must be [hdim, state_dim], got {w1.shape}"
    assert b1.shape == (H,), f"b1 must be [hdim], got {b1.shape}"
    assert w2.shape == (1, H), f"w2 must be [1, hdim] (PyTorch layout), got {w2.shape}"
    assert b2.shape == (1,), f"b2 must be [1], got {b2.shape}"

    # Batch tile: kernel is memory-bound, so use large tiles (cap 32768 lanes)
    # to amortize per-step grid overhead, but keep >= 2 blocks whenever B
    # allows so the "parallel" batch axis can shard across v7x's two TCs.
    if block_b is None:
        half = _round_up(pl.cdiv(B, 2), 128)
        block_b = min(32768, half)
    block_b = max(128, (block_b // 128) * 128)
    grid_b = pl.cdiv(B, block_b)
    b_pad = grid_b * block_b
    # Note: x is NOT padded. Pallas pads boundary reads of the last (partial)
    # block; the garbage stays confined to output columns >= B (each output
    # column depends only on its own input row) and is sliced off below.

    # Tiny weights cast once (negligible traffic); x stays untouched in HBM.
    w1c = w1.astype(mxu_dtype)                                 # [H, S]
    b1c = b1.reshape(H, 1).astype(jnp.float32)                 # [H, 1]
    w2c = w2.reshape(H, 1).astype(jnp.float32)                 # [H, 1]
    b2c = b2.reshape(1, 1).astype(jnp.float32)                 # [1, 1] -> SMEM

    x_item = jnp.dtype(x.dtype).itemsize
    x_tile = block_b * S * x_item
    out_tile = block_b * 4
    w_bytes = (w1c.size * jnp.dtype(mxu_dtype).itemsize
               + (b1c.size + w2c.size + b2c.size) * 4)
    # 2x double-buffered x/out tiles + resident weights + in-kernel bf16 /
    # transpose temporaries + slack; capped well under v7x's 64 MiB physical.
    vmem_limit = int(min(max(6 * x_tile + 4 * out_tile + 4 * w_bytes + (2 << 20),
                             8 << 20),
                         40 << 20))

    cost = pl.CostEstimate(
        flops=2 * b_pad * H * (S + 1),
        transcendentals=b_pad * (H + 1),
        bytes_accessed=(x.size * x_item + w_bytes + b_pad * 4),
    )

    out_row = pl.pallas_call(
        _critic_kernel,
        out_shape=jax.ShapeDtypeStruct((1, b_pad), jnp.float32),
        grid=(grid_b,),
        in_specs=[
            # x in native layout, tiled along the batch (sublane) axis; Pallas
            # double-buffers these tiles.  (If profiling still shows exposed
            # DMA, pipeline_mode=pl.Buffered(3) on this spec is the next knob.)
            pl.BlockSpec((block_b, S), lambda i: (i, 0)),
            pl.BlockSpec((H, S), lambda i: (0, 0)),             # w1 (resident)
            pl.BlockSpec((H, 1), lambda i: (0, 0)),             # b1 (resident)
            pl.BlockSpec((H, 1), lambda i: (0, 0)),             # w2 (resident)
            pl.BlockSpec(memory_space=pltpu.MemorySpace.SMEM),  # b2 scalar
        ],
        out_specs=pl.BlockSpec((1, block_b), lambda i: (0, i)),
        compiler_params=pltpu.CompilerParams(
            dimension_semantics=("parallel",),
            vmem_limit_bytes=vmem_limit,
        ),
        cost_estimate=cost,
    )(x, w1c, b1c, w2c, b2c)

    return out_row[0, :B].reshape(B, 1)


def init_params(key, state_dim, hdim):
    """Deterministic init matching nn.Linear + xavier_uniform_ (PyTorch layout)."""
    k1, k2, k3, k4 = jax.random.split(key, 4)

    bound1 = float(np.sqrt(6.0 / (state_dim + hdim)))
    w1 = jax.random.uniform(k1, (hdim, state_dim), jnp.float32, -bound1, bound1)
    bb1 = 1.0 / float(np.sqrt(state_dim))
    b1 = jax.random.uniform(k2, (hdim,), jnp.float32, -bb1, bb1)

    bound2 = float(np.sqrt(6.0 / (hdim + 1)))
    w2 = jax.random.uniform(k3, (1, hdim), jnp.float32, -bound2, bound2)
    bb2 = 1.0 / float(np.sqrt(hdim))
    b2 = jax.random.uniform(k4, (1,), jnp.float32, -bb2, bb2)

    return w1, b1, w2, b2


if __name__ == "__main__":
    key = jax.random.PRNGKey(0)
    kx, kp = jax.random.split(key)

    batch, state_dim, hdim = 200, 16, 32
    x = jax.random.normal(kx, (batch, state_dim), jnp.float32)
    w1, b1, w2, b2 = init_params(kp, state_dim, hdim)

    # Default tiling for B=200 -> block_b=128, grid=(2,): exercises the
    # multi-block path and the partial (boundary-padded) last x block.
    out = critic_forward(x, w1, b1, w2, b2)
    out = jax.block_until_ready(out)
    assert out.shape == (batch, 1)

    # Reference in plain JAX (same math as the PyTorch module, f32 throughout).
    ref = jax.nn.sigmoid(jnp.tanh(x @ w1.T + b1) @ w2.T + b2)
    # bf16 MXU inputs (f32 accumulation/activations) -> relaxed tolerance.
    np.testing.assert_allclose(np.asarray(out), np.asarray(ref),
                               rtol=2e-2, atol=2e-2)

    print("KERNEL_OK")
</pallas_src>

<mosaic_0001>
module attributes {stable_mosaic.version = 11 : i64} {
  func.func @_critic_kernel(%arg0: i32, %arg1: memref<128x16xf32, #tpu.memory_space<vmem>>, %arg2: memref<32x16xbf16, #tpu.memory_space<vmem>>, %arg3: memref<32x1xf32, #tpu.memory_space<vmem>>, %arg4: memref<32x1xf32, #tpu.memory_space<vmem>>, %arg5: memref<1x1xf32, #tpu.memory_space<smem>>, %arg6: memref<1x128xf32, #tpu.memory_space<vmem>>) attributes {dimension_semantics = [#tpu.dimension_semantics<parallel>], iteration_bounds = array<i64: 2>, scalar_prefetch = 0 : i64, scratch_operands = 0 : i64, tpu.core_type = #tpu.core_type<tc>, window_params = [{transform_indices = @transform_0, window_bounds = array<i64: 128, 16>}, {pipeline_mode = #tpu.pipeline_mode<synchronous>, transform_indices = @transform_1, window_bounds = array<i64: 32, 16>}, {pipeline_mode = #tpu.pipeline_mode<synchronous>, transform_indices = @transform_2, window_bounds = array<i64: 32, 1>}, {pipeline_mode = #tpu.pipeline_mode<synchronous>, transform_indices = @transform_3, window_bounds = array<i64: 32, 1>}, {transform_indices = @transform_4, window_bounds = array<i64: 1, 1>}, {transform_indices = @transform_5, window_bounds = array<i64: 1, 128>}]} {
    %c0 = arith.constant 0 : index
    %c0_0 = arith.constant 0 : index
    %0 = vector.load %arg1[%c0, %c0_0] : memref<128x16xf32, #tpu.memory_space<vmem>>, vector<128x16xf32>
    %1 = arith.truncf %0 : vector<128x16xf32> to vector<128x16xbf16>
    %c0_1 = arith.constant 0 : index
    %c0_2 = arith.constant 0 : index
    %2 = vector.load %arg2[%c0_1, %c0_2] : memref<32x16xbf16, #tpu.memory_space<vmem>>, vector<32x16xbf16>
    %cst = arith.constant dense<0.000000e+00> : vector<32x128xf32>
    %3 = tpu.matmul %2, %1, %cst {dimension_numbers = #tpu.dot_dimension_numbers<[1], [1], [0], [0], [0, 0, 1, 0], [], []>} : vector<32x16xbf16>, vector<128x16xbf16>, vector<32x128xf32> -> vector<32x128xf32>
    %c0_3 = arith.constant 0 : index
    %c0_4 = arith.constant 0 : index
    %4 = vector.load %arg3[%c0_3, %c0_4] : memref<32x1xf32, #tpu.memory_space<vmem>>, vector<32x1xf32>
    %5 = vector.broadcast %4 : vector<32x1xf32> to vector<32x128xf32>
    %6 = arith.addf %3, %5 : vector<32x128xf32>
    %7 = math.tanh %6 : vector<32x128xf32>
    %c0_5 = arith.constant 0 : index
    %c0_6 = arith.constant 0 : index
    %8 = vector.load %arg4[%c0_5, %c0_6] : memref<32x1xf32, #tpu.memory_space<vmem>>, vector<32x1xf32>
    %9 = vector.broadcast %8 : vector<32x1xf32> to vector<32x128xf32>
    %10 = arith.mulf %7, %9 : vector<32x128xf32>
    %cst_7 = arith.constant dense<0.000000e+00> : vector<128xf32>
    %11 = vector.multi_reduction <add>, %10, %cst_7 [0] : vector<32x128xf32> to vector<128xf32>
    %12 = vector.shape_cast %11 : vector<128xf32> to vector<1x128xf32>
    %c0_8 = arith.constant 0 : index
    %c0_9 = arith.constant 0 : index
    %13 = memref.load %arg5[%c0_8, %c0_9] : memref<1x1xf32, #tpu.memory_space<smem>>
    %14 = vector.broadcast %13 : f32 to vector<1x128xf32>
    %15 = arith.addf %12, %14 : vector<1x128xf32>
    %16 = arith.negf %15 : vector<1x128xf32>
    %17 = math.exp %16 : vector<1x128xf32>
    %cst_10 = arith.constant 1.000000e+00 : f32
    %18 = vector.broadcast %cst_10 : f32 to vector<1x128xf32>
    %19 = arith.addf %18, %17 : vector<1x128xf32>
    %20 = arith.divf %18, %19 : vector<1x128xf32>
    %c0_11 = arith.constant 0 : index
    %c0_12 = arith.constant 0 : index
    %21 = vector.load %arg6[%c0_11, %c0_12] : memref<1x128xf32, #tpu.memory_space<vmem>>, vector<1x128xf32>
    tpu.vector_store %arg6[%c0_11, %c0_12], %20 {strides = array<i32>} : memref<1x128xf32, #tpu.memory_space<vmem>>, vector<1x128xf32>,
    return
  }
  func.func @transform_0(%arg0: i32) -> (i32, i32) {
    %c0_i32 = arith.constant 0 : i32
    %c0_i32_0 = arith.constant 0 : i32
    return %arg0, %c0_i32 : i32, i32
  }
  func.func @transform_1(%arg0: i32) -> (i32, i32) {
    %c0_i32 = arith.constant 0 : i32
    %c0_i32_0 = arith.constant 0 : i32
    %c0_i32_1 = arith.constant 0 : i32
    return %c0_i32, %c0_i32_0 : i32, i32
  }
  func.func @transform_2(%arg0: i32) -> (i32, i32) {
    %c0_i32 = arith.constant 0 : i32
    %c0_i32_0 = arith.constant 0 : i32
    %c0_i32_1 = arith.constant 0 : i32
    return %c0_i32, %c0_i32_0 : i32, i32
  }
  func.func @transform_3(%arg0: i32) -> (i32, i32) {
    %c0_i32 = arith.constant 0 : i32
    %c0_i32_0 = arith.constant 0 : i32
    %c0_i32_1 = arith.constant 0 : i32
    return %c0_i32, %c0_i32_0 : i32, i32
  }
  func.func @transform_4(%arg0: i32) -> (i32, i32) {
    %c0_i32 = arith.constant 0 : i32
    %c0_i32_0 = arith.constant 0 : i32
    %c0_i32_1 = arith.constant 0 : i32
    return %c0_i32, %c0_i32_0 : i32, i32
  }
  func.func @transform_5(%arg0: i32) -> (i32, i32) {
    %c0_i32 = arith.constant 0 : i32
    %c0_i32_0 = arith.constant 0 : i32
    return %c0_i32, %arg0 : i32, i32
  }
}

</mosaic_0001>

<llo_original>
// kernel: tpu_custom_call.1
$region0: #{tpu_custom_call.1}
  #allocation0 [shape = 'u32[]', space=smem, size = 0x4, offset = 0x4, fixed_abs, tag = 'smem constant byte address 0x4 - core index']
  #allocation1 [shape = 'u32[72,128]{1,0:T(1,128)}', space=vmem, size = 0x9000, scoped, tag = 'internal scratch']
  #allocation2 [shape = 'f32[1,1]{1,0:T(1,128)S(6)}', space=smem, size = 0x200, scoped, tag = 'scoped memory for tpu_custom_call.1']
  %s0 = inlined_call_operand.vmem [shape: f32[200,16], index: 0, kind: input, shape index: {}]
  %s1 = inlined_call_operand.vmem [shape: bf16[32,16], index: 1, kind: input, shape index: {}]
  %s2 = inlined_call_operand.vmem [shape: f32[32,1], index: 2, kind: input, shape index: {}]
  %s3 = inlined_call_operand.vmem [shape: f32[32,1], index: 3, kind: input, shape index: {}]
  %s4 = inlined_call_operand.<no memory space> [shape: f32[1,1], index: 4, kind: input, shape index: {}]
  %s5 = inlined_call_operand.hbm [shape: f32[1,256], index: 5, kind: output, shape index: {}]
  %s6 = sld [smem:[#allocation0]]
  $region53: #{tpu_custom_call.1} parent=0
    _
  %s8 = ssub.s32 1, %s6
  %s9 = scalar_select 0, %s8, %s6
  %10 = sst [smem:[#allocation2]] %s4
  $region1: #{tpu_custom_call.1} parent=0
    #allocation3 [shape = 'u8[1024]{0}', space=vmem, size = 0x400, scoped, tag = 'output window, operand 0']
    #allocation4 [shape = 's32[2]{0}', space=sflag, size = 0x8, scoped, tag = 'scoped memory for tpu_custom_call.1']
    %11 = vsyncpa [#allocation4], 0
    %s12 = scalar_lea.sflag [#allocation4], 1
    %13 = vsyncpa %s12, 0
    loop: start=0, step=1, limit=4
    $region2: #{tpu_custom_call.1} parent=1 // loop_pre_header
      _
    $region3: #{tpu_custom_call.1} parent=1 // loop_header
      %s15 = sphi 0, %s19
      %p16 = scmp.ge.s32.totalorder %s15, 4
      %s25 = sphi 0, %s27
      %s28 = sphi 0, %s25
      %s29 = sphi 0, %s28
      %s45 = sphi 0, %s29
      %s49 = sphi 0, %s49
      %s51 = sphi 0, %s49
      %s52 = sphi 0, %s51
      %s66 = sphi 0, %s52
      %s70 = sphi 0, %s70
      %s72 = sphi 0, %s70
      %s73 = sphi 0, %s72
      %s87 = sphi 0, %s73
      %s91 = sphi 0, %s91
      %s93 = sphi 0, %s91
      %s94 = sphi 0, %s93
      %s108 = sphi 0, %s94
      %s112 = sphi 0, %s112
      %s114 = sphi 0, %s112
      %s115 = sphi 0, %s114
      %s129 = sphi 0, %s115
      %s135 = sphi 0, %s137
      %s138 = sphi 0, %s135
      %s139 = sphi 0, %s138
      %s155 = sphi 0, %s139
    $region4: #{tpu_custom_call.1} parent=1 // loop_header_branch
      %18 = sbr.rel (%p16) target = $region8
    $region5: #{tpu_custom_call.1} parent=1 // loop_body
      %s20 = ssub.s32 %s15, 1
      %s21 = ssub.s32 %s15, 2
      %s22 = sadd.s32 %s15, 1
      %s23 = ssub.s32 %s15, %s22
      %p24 = scmp.eq.s32.totalorder %s23, 0
      %s26 = sadd.s32 %s25, 1
      %s27 = scalar_select %p24, %s25, %s26
      %p30 = pneg %p24
      %p31 = scmp.eq.s32.totalorder %s15, 1
      %p32 = por %p30, %p31
      %p33 = scmp.ne.s32.totalorder %s25, %s28
      %p34 = scmp.eq.s32.totalorder %s15, 0
      %p35 = por %p33, %p34
      %p36 = scmp.ne.s32.totalorder %s25, %s28
      %p37 = scmp.eq.s32.totalorder %s20, 1
      %p38 = por %p36, %p37
      %p39 = scmp.ne.s32.totalorder %s28, %s29
      %p40 = scmp.eq.s32.totalorder %s20, 0
      %p41 = por %p39, %p40
      %p42 = scmp.ne.s32.totalorder %s28, %s29
      %p43 = scmp.eq.s32.totalorder %s21, 1
      %p44 = por %p42, %p43
      %p46 = scmp.ne.s32.totalorder %s29, %s45
      %p47 = scmp.eq.s32.totalorder %s21, 0
      %p48 = por %p46, %p47
      %s50 = sadd.s32 %s49, 1
      %p53 = scmp.eq.s32.totalorder %s15, 1
      %p54 = scmp.ne.s32.totalorder %s49, %s51
      %p55 = scmp.eq.s32.totalorder %s15, 0
      %p56 = por %p54, %p55
      %p57 = scmp.ne.s32.totalorder %s49, %s51
      %p58 = scmp.eq.s32.totalorder %s20, 1
      %p59 = por %p57, %p58
      %p60 = scmp.ne.s32.totalorder %s51, %s52
      %p61 = scmp.eq.s32.totalorder %s20, 0
      %p62 = por %p60, %p61
      %p63 = scmp.ne.s32.totalorder %s51, %s52
      %p64 = scmp.eq.s32.totalorder %s21, 1
      %p65 = por %p63, %p64
      %p67 = scmp.ne.s32.totalorder %s52, %s66
      %p68 = scmp.eq.s32.totalorder %s21, 0
      %p69 = por %p67, %p68
      %s71 = sadd.s32 %s70, 1
      %p74 = scmp.eq.s32.totalorder %s15, 1
      %p75 = scmp.ne.s32.totalorder %s70, %s72
      %p76 = scmp.eq.s32.totalorder %s15, 0
      %p77 = por %p75, %p76
      %p78 = scmp.ne.s32.totalorder %s70, %s72
      %p79 = scmp.eq.s32.totalorder %s20, 1
      %p80 = por %p78, %p79
      %p81 = scmp.ne.s32.totalorder %s72, %s73
      %p82 = scmp.eq.s32.totalorder %s20, 0
      %p83 = por %p81, %p82
      %p84 = scmp.ne.s32.totalorder %s72, %s73
      %p85 = scmp.eq.s32.totalorder %s21, 1
      %p86 = por %p84, %p85
      %p88 = scmp.ne.s32.totalorder %s73, %s87
      %p89 = scmp.eq.s32.totalorder %s21, 0
      %p90 = por %p88, %p89
      %s92 = sadd.s32 %s91, 1
      %p95 = scmp.eq.s32.totalorder %s15, 1
      %p96 = scmp.ne.s32.totalorder %s91, %s93
      %p97 = scmp.eq.s32.totalorder %s15, 0
      %p98 = por %p96, %p97
      %p99 = scmp.ne.s32.totalorder %s91, %s93
      %p100 = scmp.eq.s32.totalorder %s20, 1
      %p101 = por %p99, %p100
      %p102 = scmp.ne.s32.totalorder %s93, %s94
      %p103 = scmp.eq.s32.totalorder %s20, 0
      %p104 = por %p102, %p103
      %p105 = scmp.ne.s32.totalorder %s93, %s94
      %p106 = scmp.eq.s32.totalorder %s21, 1
      %p107 = por %p105, %p106
      %p109 = scmp.ne.s32.totalorder %s94, %s108
      %p110 = scmp.eq.s32.totalorder %s21, 0
      %p111 = por %p109, %p110
      %s113 = sadd.s32 %s112, 1
      %p116 = scmp.eq.s32.totalorder %s15, 1
      %p117 = scmp.ne.s32.totalorder %s112, %s114
      %p118 = scmp.eq.s32.totalorder %s15, 0
      %p119 = por %p117, %p118
      %p120 = scmp.ne.s32.totalorder %s112, %s114
      %p121 = scmp.eq.s32.totalorder %s20, 1
      %p122 = por %p120, %p121
      %p123 = scmp.ne.s32.totalorder %s114, %s115
      %p124 = scmp.eq.s32.totalorder %s20, 0
      %p125 = por %p123, %p124
      %p126 = scmp.ne.s32.totalorder %s114, %s115
      %p127 = scmp.eq.s32.totalorder %s21, 1
      %p128 = por %p126, %p127
      %p130 = scmp.ne.s32.totalorder %s115, %s129
      %p131 = scmp.eq.s32.totalorder %s21, 0
      %p132 = por %p130, %p131
      %s133 = ssub.s32 %s15, %s22
      %p134 = scmp.eq.s32.totalorder %s133, 0
      %s136 = sadd.s32 %s135, 1
      %s137 = scalar_select %p134, %s135, %s136
      %p140 = pneg %p134
      %p141 = scmp.eq.s32.totalorder %s15, 1
      %p142 = por %p140, %p141
      %p143 = scmp.ne.s32.totalorder %s135, %s138
      %p144 = scmp.eq.s32.totalorder %s15, 0
      %p145 = por %p143, %p144
      %p146 = scmp.ne.s32.totalorder %s135, %s138
      %p147 = scmp.eq.s32.totalorder %s20, 1
      %p148 = por %p146, %p147
      %p149 = scmp.ne.s32.totalorder %s138, %s139
      %p150 = scmp.eq.s32.totalorder %s20, 0
      %p151 = por %p149, %p150
      %p152 = scmp.ne.s32.totalorder %s138, %s139
      %p153 = scmp.eq.s32.totalorder %s21, 1
      %p154 = por %p152, %p153
      %p156 = scmp.ne.s32.totalorder %s139, %s155
      %p157 = scmp.eq.s32.totalorder %s21, 0
      %p158 = por %p156, %p157
      %p159 = scmp.le.s32.totalorder 1, %s15
      %p160 = scmp.lt.s32.totalorder %s15, 3
      %p161 = pnand %p159, %p160
      %p162 = pneg %p161
      // Predicated region
      $region9: #{tpu_custom_call.1} parent=5 // pred_check
        _
      $region10: #{tpu_custom_call.1} parent=5 // pred_check_branch
        %164 = sbr.rel (%p161) target = $region12
      $region11: #{tpu_custom_call.1} parent=5 // pred_region
        %s165 = ssub.s32 %s15, 1
        // Predicated region
        $region13: #{tpu_custom_call.1} parent=11 // pred_check
          %p166 = pneg %p62
        $region14: #{tpu_custom_call.1} parent=11 // pred_check_branch
          %168 = sbr.rel (%p166) target = $region16
        $region15: #{tpu_custom_call.1} parent=11 // pred_region
          _
        $region16: #{tpu_custom_call.1} parent=11 // pred_fallthru
          _
        // Predicated region
        $region17: #{tpu_custom_call.1} parent=11 // pred_check
          %p169 = pneg %p83
        $region18: #{tpu_custom_call.1} parent=11 // pred_check_branch
          %171 = sbr.rel (%p169) target = $region20
        $region19: #{tpu_custom_call.1} parent=11 // pred_region
          _
        $region20: #{tpu_custom_call.1} parent=11 // pred_fallthru
          _
        // Predicated region
        $region21: #{tpu_custom_call.1} parent=11 // pred_check
          %p172 = pneg %p104
        $region22: #{tpu_custom_call.1} parent=11 // pred_check_branch
          %174 = sbr.rel (%p172) target = $region24
        $region23: #{tpu_custom_call.1} parent=11 // pred_region
          _
        $region24: #{tpu_custom_call.1} parent=11 // pred_fallthru
          _
        // Predicated region
        $region25: #{tpu_custom_call.1} parent=11 // pred_check
          %p175 = pneg %p125
        $region26: #{tpu_custom_call.1} parent=11 // pred_check_branch
          %177 = sbr.rel (%p175) target = $region28
        $region27: #{tpu_custom_call.1} parent=11 // pred_region
          _
        $region28: #{tpu_custom_call.1} parent=11 // pred_fallthru
          _
      $region12: #{tpu_custom_call.1} parent=5 // pred_fallthru
        _
      %p178 = scmp.lt.s32.totalorder %s15, 2
      // Predicated region
      $region29: #{tpu_custom_call.1} parent=5 // pred_check
        %p179 = pneg %p178
      $region30: #{tpu_custom_call.1} parent=5 // pred_check_branch
        %181 = sbr.rel (%p179) target = $region32
      $region31: #{tpu_custom_call.1} parent=5 // pred_region
        // Predicated region
        $region33: #{tpu_custom_call.1} parent=31 // pred_check
          %p182 = pneg %p35
        $region34: #{tpu_custom_call.1} parent=31 // pred_check_branch
          %184 = sbr.rel (%p182) target = $region36
        $region35: #{tpu_custom_call.1} parent=31 // pred_region
          %s185 = smul.u32 16, %s15
          %s186 = ssub.s32 25, %s185
          %p187 = scmp.lt.s32.totalorder %s186, 16
          %s188 = scalar_select %p187, %s186, 16
          %s189 = smul.u32 8, %s188
          %p190 = scmp.lt.s32.totalorder %s185, 24
          %s191 = scalar_select %p190, %s185, 24
          %s192 = smul.addr %s191, 8
          %s193 = scalar_lea.vmem %s0, %s192
          %s194 = smul.u32 16, %s15
          %s195 = ssub.s32 25, %s194
          %p196 = scmp.lt.s32.totalorder %s195, 16
          %s197 = scalar_select %p196, %s195, 16
          %s198 = smul.u32 8, %s197
        $region36: #{tpu_custom_call.1} parent=31 // pred_fallthru
          _
      $region32: #{tpu_custom_call.1} parent=5 // pred_fallthru
        _
      %p199 = scmp.le.s32.totalorder 1, %s15
      %p200 = scmp.lt.s32.totalorder %s15, 3
      %p201 = pnand %p199, %p200
      %p202 = pneg %p201
      // Predicated region
      $region37: #{tpu_custom_call.1} parent=5 // pred_check
        _
      $region38: #{tpu_custom_call.1} parent=5 // pred_check_branch
        %204 = sbr.rel (%p201) target = $region40
      $region39: #{tpu_custom_call.1} parent=5 // pred_region
        %s205 = ssub.s32 %s15, 1
        %s206 = smul.u32 16, %s20
        %s207 = ssub.s32 25, %s206
        %p208 = scmp.lt.s32.totalorder %s207, 16
        %s209 = scalar_select %p208, %s207, 16
        %s210 = smul.u32 8, %s209
        %p211 = scmp.lt.s32.totalorder %s206, 24
        %s212 = scalar_select %p211, %s206, 24
        %s213 = smul.addr %s212, 8
        %s214 = scalar_lea.vmem %s0, %s213
        %p215 = pneg %p41
        %p216 = pneg %p38
        %p217 = pneg %p62
        %p218 = pneg %p59
        %p219 = pneg %p83
        %p220 = pneg %p80
        %p221 = pneg %p104
        %p222 = pneg %p101
        %p223 = pneg %p125
        %p224 = pneg %p122
        %p225 = pneg %p151
        %p226 = pneg %p148
        %s227 = sand.u32 %s138, 1
        %s228 = scalar_lea.sflag [#allocation4], %s227
        %s229 = sand.u32 %s138, 1
        %s230 = scalar_lea.vmem [#allocation3], %s229
        %s231 = smul.u32 16, %s20
        %s232 = ssub.s32 25, %s231
        %p233 = scmp.lt.s32.totalorder %s232, 16
        %s234 = scalar_select %p233, %s232, 16
        %s235 = smul.u32 8, %s234
        %p236 = scmp.lt.s32.totalorder %s231, 24
        %s237 = scalar_select %p236, %s231, 24
        %s238 = smul.addr %s237, 8
        %s239 = scalar_lea.vmem %s0, %s238
        %s240 = smul.u32 16, %s20
        %s241 = ssub.s32 25, %s240
        %p242 = scmp.lt.s32.totalorder %s241, 16
        %s243 = scalar_select %p242, %s241, 16
        %s244 = smul.u32 8, %s243
        %v245 = vld [vmem:[%s239] sm:$0xff]
        %v246 = vld [vmem:[%s239 + $0x8] sm:$0xff]
        %v247 = vld [vmem:[%s239 + $0x10] sm:$0xff]
        %v248 = vld [vmem:[%s239 + $0x18] sm:$0xff]
        %v249 = vld [vmem:[%s239 + $0x20] sm:$0xff]
        %v250 = vld [vmem:[%s239 + $0x28] sm:$0xff]
        %v251 = vld [vmem:[%s239 + $0x30] sm:$0xff]
        %v252 = vld [vmem:[%s239 + $0x38] sm:$0xff]
        %v253 = vld [vmem:[%s239 + $0x40] sm:$0xff]
        %v254 = vld [vmem:[%s239 + $0x48] sm:$0xff]
        %v255 = vld [vmem:[%s239 + $0x50] sm:$0xff]
        %v256 = vld [vmem:[%s239 + $0x58] sm:$0xff]
        %v257 = vld [vmem:[%s239 + $0x60] sm:$0xff]
        %v258 = vld [vmem:[%s239 + $0x68] sm:$0xff]
        %v259 = vld [vmem:[%s239 + $0x70] sm:$0xff]
        %v260 = vld [vmem:[%s239 + $0x78] sm:$0xff]
        %v261 = vpack.c.bf16 %v246, %v245
        %v262 = vpack.c.bf16 %v248, %v247
        %v263 = vpack.c.bf16 %v250, %v249
        %v264 = vpack.c.bf16 %v252, %v251
        %v265 = vpack.c.bf16 %v254, %v253
        %v266 = vpack.c.bf16 %v256, %v255
        %v267 = vpack.c.bf16 %v258, %v257
        %v268 = vpack.c.bf16 %v260, %v259
        %v269 = vld [vmem:[%s1] sm:$0xf]
        %v270 = vld [vmem:[%s1 + $0x4] sm:$0xf]
        %v271 = vld [vmem:[%s1 + $0x8] sm:$0xf]
        %v272 = vld [vmem:[%s1 + $0xc] sm:$0xf]
        %v273 = vld [vmem:[%s2] sm:$0xff]
        %v274 = vld [vmem:[%s2 + $0x8] sm:$0xff]
        %v275 = vld [vmem:[%s2 + $0x10] sm:$0xff]
        %v276 = vld [vmem:[%s2 + $0x18] sm:$0xff]
        %278 = vset.pattern.permute.xlu0 0
        %279 = vperm.xlu0 %278, %v273
        %v280 = vpop.permute.xlu0 %279
        %283 = vset.pattern.permute.xlu0 0
        %284 = vperm.xlu0 %283, %v274
        %v285 = vpop.permute.xlu0 %284
        %288 = vset.pattern.permute.xlu0 0
        %289 = vperm.xlu0 %288, %v275
        %v290 = vpop.permute.xlu0 %289
        %293 = vset.pattern.permute.xlu0 0
        %294 = vperm.xlu0 %293, %v276
        %v295 = vpop.permute.xlu0 %294
        %v301 = vunpack.c.l.b16 %v269
        %v302 = vunpack.c.l.b16 %v270
        %v303 = vunpack.c.l.b16 %v271
        %v304 = vunpack.c.l.b16 %v272
        %v305 = vpack.c.b16 %v302, %v301
        %v306 = vpack.c.b16 %v304, %v303
        %vm307 = vcmask 130048
        %v309 = vsel %vm307, %v305, 0
        %v312 = vsel %vm307, %v306, 0
        %v315 = vsel %vm307, %v261, 0
        %v318 = vsel %vm307, %v262, 0
        %v321 = vsel %vm307, %v263, 0
        %v324 = vsel %vm307, %v264, 0
        %v327 = vsel %vm307, %v265, 0
        %v330 = vsel %vm307, %v266, 0
        %v333 = vsel %vm307, %v267, 0
        %v336 = vsel %vm307, %v268, 0
        %338 = vmatpush.bf16.xpose.msra.mxu0 %v336
        %339 = vmatpush.bf16.xpose.msra.mxu0 %v333
        %340 = vmatpush.bf16.xpose.msra.mxu0 %v330
        %341 = vmatpush.bf16.xpose.msra.mxu0 %v327
        %342 = vmatpush.bf16.xpose.msra.mxu0 %v324
        %343 = vmatpush.bf16.xpose.msra.mxu0 %v321
        %344 = vmatpush.bf16.xpose.msra.mxu0 %v318
        %345 = vmatpush.bf16.xpose.msra.mxu0 %v315
        %346 = vmatmul.bf16.gmra.mxu0 %v309
        %v347 = vpop.f32.mrf.mxu0
        %v348 = vadd.f32 %v280, %v347
        %v349 = vpop.f32.mrf.mxu0
        %v350 = vadd.f32 %v285, %v349
        %351 = vmatmul.bf16.gmra.mxu0 %v312
        %v352 = vpop.f32.mrf.mxu0
        %v353 = vadd.f32 %v290, %v352
        %v354 = vpop.f32.mrf.mxu0
        %v355 = vadd.f32 %v295, %v354
        %356 = vdwg.mxu0
        %v357 = vtanh.pop %v348
        %v358 = vtanh.pop %v350
        %v359 = vtanh.pop %v353
        %v360 = vtanh.pop %v355
        %v361 = vld [vmem:[%s3] sm:$0xff]
        %v362 = vld [vmem:[%s3 + $0x8] sm:$0xff]
        %v363 = vld [vmem:[%s3 + $0x10] sm:$0xff]
        %v364 = vld [vmem:[%s3 + $0x18] sm:$0xff]
        %366 = vset.pattern.permute.xlu0 0
        %367 = vperm.xlu0 %366, %v361
        %v368 = vpop.permute.xlu0 %367
        %371 = vset.pattern.permute.xlu0 0
        %372 = vperm.xlu0 %371, %v362
        %v373 = vpop.permute.xlu0 %372
        %376 = vset.pattern.permute.xlu0 0
        %377 = vperm.xlu0 %376, %v363
        %v378 = vpop.permute.xlu0 %377
        %381 = vset.pattern.permute.xlu0 0
        %382 = vperm.xlu0 %381, %v364
        %v383 = vpop.permute.xlu0 %382
        %v385 = vmul.f32 %v357, %v368
        %v386 = vmul.f32 %v358, %v373
        %v387 = vmul.f32 %v359, %v378
        %v388 = vmul.f32 %v360, %v383
        %v389 = vadd.f32 %v385, %v386
        %v390 = vadd.f32 %v389, %v387
        %v391 = vadd.f32 %v390, %v388
        %v392 = vrot.slane %v391, 4
        %v393 = vadd.f32 %v391, %v392
        %v394 = vrot.slane %v393, 2
        %v395 = vadd.f32 %v393, %v394
        %v396 = vrot.slane %v395, 1
        %v397 = vadd.f32 %v395, %v396
        %s398 = sld [smem:[#allocation2]]
        %v399 = vstv %s398
        %v400 = vadd.f32 %v397, %v399
        %v401 = vxor.u32 %v400, 2147483648
        %v402 = vmul.f32 %v401, 1.442695
        %v403 = vpow.pop %v402
        %v404 = vadd.f32 %v403, 1.0
        %v405 = vrcp.pop %v404
        %v406 = vmul.f32 %v404, %v405
        %v407 = vsub.f32 1.0, %v406
        %v408 = vmul.f32 %v405, %v407
        %v409 = vadd.f32 %v405, %v408
        %vm410 = vweird.f32 %v404
        %vm411 = vweird.f32 %v405
        %vm412 = vmor %vm410, %vm411
        %v413 = vsel %vm412, %v405, %v409
        %v414 = vand.u32 2147483647, %v404
        %vm415 = vcmp.eq.f32.partialorder %v414, 8.507059e+37
        %v416 = vand.u32 %v404, 2147483648
        %v417 = vor.u32 1.1754944e-38, %v416
        %v418 = vsel %vm415, %v417, %v413
        %v419 = vmul.f32 1.0, %v418
        %420 = vst [vmem:[%s230] sm:$0x1] %v419
        %s421 = sand.u32 %s138, 1
        %s422 = scalar_lea.sflag [#allocation4], %s421
        %s423 = sand.u32 %s138, 1
        %s424 = scalar_lea.vmem [#allocation3], %s423
        // Predicated region
        $region41: #{tpu_custom_call.1} parent=39 // pred_check
          %p425 = pneg %p148
        $region42: #{tpu_custom_call.1} parent=39 // pred_check_branch
          %427 = sbr.rel (%p425) target = $region44
        $region43: #{tpu_custom_call.1} parent=39 // pred_region
          %429 = vsyncadd %s422, 0
          %s430 = scalar_lea.hbm %s5, %s20
          %s432 = sshll.u32 %s424, 4
          %s433 = int_to_ptr.vmem [resolvable:$true] %s432
          %s434 = sshll.u32 %s430, 4
          %s435 = int_to_ptr.hbm [resolvable:$true] %s434
          %437 = dma.vmem_to_hbm [thread:$0]  %s433, 16, %s435, %s422
        $region44: #{tpu_custom_call.1} parent=39 // pred_fallthru
          _
      $region40: #{tpu_custom_call.1} parent=5 // pred_fallthru
        _
      %p438 = scmp.le.s32.totalorder 2, %s15
      // Predicated region
      $region45: #{tpu_custom_call.1} parent=5 // pred_check
        %p439 = pneg %p438
      $region46: #{tpu_custom_call.1} parent=5 // pred_check_branch
        %441 = sbr.rel (%p439) target = $region48
      $region47: #{tpu_custom_call.1} parent=5 // pred_region
        %s442 = ssub.s32 %s15, 2
        // Predicated region
        $region49: #{tpu_custom_call.1} parent=47 // pred_check
          %p443 = pneg %p154
        $region50: #{tpu_custom_call.1} parent=47 // pred_check_branch
          %445 = sbr.rel (%p443) target = $region52
        $region51: #{tpu_custom_call.1} parent=47 // pred_region
          %s446 = sand.u32 %s139, 1
          %s447 = scalar_lea.sflag [#allocation4], %s446
          %s448 = sand.u32 %s139, 1
          %s449 = scalar_lea.vmem [#allocation3], %s448
          %451 = dma.done %s447, 16
        $region52: #{tpu_custom_call.1} parent=47 // pred_fallthru
          _
      $region48: #{tpu_custom_call.1} parent=5 // pred_fallthru
        _
    $region6: #{tpu_custom_call.1} parent=1 // loop_footer
      %s19 = sadd.s32 1, %s15
    $region7: #{tpu_custom_call.1} parent=1 // loop_footer_branch
      %14 = sbr.rel target = $region3
    $region8: #{tpu_custom_call.1} parent=1 // loop_exit
      _
    %452 = vsyncpa [#allocation4], 1
    %s453 = scalar_lea.sflag [#allocation4], 1
    %454 = vsyncpa %s453, 1

</llo_original>
